<compile_context>
chip_gen: v5e
topology: v5e:2x2
jax: 0.10.0
libtpu: 0.0.40
codegen_flags: <defaults>
</compile_context>

<pallas_src>
import math
from functools import partial

import jax
import jax.numpy as jnp
from jax import lax
from jax.experimental import pallas as pl
from jax.experimental.pallas import tpu as pltpu

IN_DIM = 4 * 9 * 29   # 1044
HID_DIM = 128
OUT_DIM = 192

K_PAD = 1152          # 9 * 128  : reduction dim padded to a lane multiple
N_PAD = 256           # 2 * 128  : lane-dense output width (sliced back to 192)
STRIP = 128           # in-kernel row strip for large batch tiles
MAX_TB = 512          # max batch tile (safe under v7x's 64 MiB VMEM)


def _round_up(n, m):
    return ((n + m - 1) // m) * m


def _encoder_kernel(x_ref, w1_ref, b1_ref, w2_ref, b2_ref, o_ref, *, n_strips):
    def strip_compute(r0, n_rows):
        xs = x_ref[pl.ds(r0, n_rows), :]
        # First linear + ReLU (MXU matmul accumulates in f32)
        h = jnp.dot(xs, w1_ref[...], preferred_element_type=jnp.float32)
        h = jnp.maximum(h + b1_ref[...], 0.0)       # b1 is (1, HID) -> broadcast
        # Second linear (cast h to the weight dtype so bf16 weights hit the bf16 MXU path)
        y = jnp.dot(h.astype(w2_ref.dtype), w2_ref[...],
                    preferred_element_type=jnp.float32) + b2_ref[...]
        o_ref[pl.ds(r0, n_rows), :] = y.astype(o_ref.dtype)

    if n_strips == 1:
        strip_compute(0, x_ref.shape[0])
    else:
        def body(s, carry):
            strip_compute(pl.multiple_of(s * STRIP, STRIP), STRIP)
            return carry
        lax.fori_loop(0, n_strips, body, 0, unroll=True)


def encoder_forward(x, w1, b1, w2, b2, *, use_bf16=False):
    """x: [B, IN_DIM] float32 -> [B, OUT_DIM] float32.

    Weights are stored as [in_features, out_features] (transposed vs. torch), so the
    kernel computes x @ W + b, equivalent to torch's x @ W.T + b.
    """
    B = x.shape[0]

    # ---- batch tile choice ---------------------------------------------------
    tb = min(MAX_TB, _round_up(B, 8))
    if tb > STRIP:
        tb = _round_up(tb, STRIP)       # strip-mined path needs TB % 128 == 0
    n_strips = tb // STRIP if tb > STRIP else 1
    b_pad = _round_up(B, tb)

    # ---- zero-padding: K -> 1152 (full MXU passes), N -> 256 (lane-dense stores)
    x_p = jnp.pad(x, ((0, b_pad - B), (0, K_PAD - IN_DIM)))
    w1_p = jnp.pad(w1, ((0, K_PAD - IN_DIM), (0, 0)))
    w2_p = jnp.pad(w2, ((0, 0), (0, N_PAD - OUT_DIM)))
    b2_p = jnp.pad(b2, ((0, 0), (0, N_PAD - OUT_DIM)))

    if use_bf16:
        # HBM-bound at realistic batches: halve x / weight traffic, keep f32 accumulation.
        x_p = x_p.astype(jnp.bfloat16)
        w1_p = w1_p.astype(jnp.bfloat16)
        w2_p = w2_p.astype(jnp.bfloat16)

    grid = (b_pad // tb,)
    flops = 2 * b_pad * (K_PAD * HID_DIM + HID_DIM * N_PAD)
    bytes_accessed = (x_p.size * x_p.dtype.itemsize
                      + w1_p.size * w1_p.dtype.itemsize
                      + b1.size * b1.dtype.itemsize
                      + w2_p.size * w2_p.dtype.itemsize
                      + b2_p.size * b2_p.dtype.itemsize
                      + b_pad * N_PAD * 4)

    out = pl.pallas_call(
        partial(_encoder_kernel, n_strips=n_strips),
        out_shape=jax.ShapeDtypeStruct((b_pad, N_PAD), jnp.float32),
        grid=grid,
        in_specs=[
            pl.BlockSpec((tb, K_PAD), lambda i: (i, 0)),       # x: tiled by batch
            pl.BlockSpec((K_PAD, HID_DIM), lambda i: (0, 0)),  # w1: resident
            pl.BlockSpec((1, HID_DIM), lambda i: (0, 0)),      # b1: resident
            pl.BlockSpec((HID_DIM, N_PAD), lambda i: (0, 0)),  # w2: resident
            pl.BlockSpec((1, N_PAD), lambda i: (0, 0)),        # b2: resident
        ],
        out_specs=pl.BlockSpec((tb, N_PAD), lambda i: (i, 0)),
        compiler_params=pltpu.CompilerParams(
            dimension_semantics=("parallel",)),
        cost_estimate=pl.CostEstimate(
            flops=flops, transcendentals=0, bytes_accessed=bytes_accessed),
    )(x_p, w1_p, b1, w2_p, b2_p)

    return out[:B, :OUT_DIM]


def init_params(key):
    """Deterministic init mimicking torch.nn.Linear defaults:
    W, b ~ U(-1/sqrt(fan_in), 1/sqrt(fan_in)); weights stored [in, out]."""
    k1, k2, k3, k4 = jax.random.split(key, 4)
    bound1 = 1.0 / math.sqrt(IN_DIM)
    bound2 = 1.0 / math.sqrt(HID_DIM)
    w1 = jax.random.uniform(k1, (IN_DIM, HID_DIM), jnp.float32, -bound1, bound1)
    b1 = jax.random.uniform(k2, (1, HID_DIM), jnp.float32, -bound1, bound1)
    w2 = jax.random.uniform(k3, (HID_DIM, OUT_DIM), jnp.float32, -bound2, bound2)
    b2 = jax.random.uniform(k4, (1, OUT_DIM), jnp.float32, -bound2, bound2)
    return w1, b1, w2, b2


if __name__ == "__main__":
    key = jax.random.PRNGKey(0)
    kx, kp, kx2 = jax.random.split(key, 3)
    w1, b1, w2, b2 = init_params(kp)

    def ref_fn(xv):
        return jnp.maximum(xv @ w1 + b1, 0.0) @ w2 + b2

    # Small batch: single tile, single strip (matches the module's typical use).
    B = 8
    x = jax.random.normal(kx, (B, IN_DIM), dtype=jnp.float32)
    out = jax.block_until_ready(encoder_forward(x, w1, b1, w2, b2))
    assert out.shape == (B, OUT_DIM)
    assert jnp.allclose(out, ref_fn(x), atol=1e-4, rtol=1e-4)

    # Larger batch: multiple grid steps + 128-row strip loop + batch padding.
    B2 = 520
    x2 = jax.random.normal(kx2, (B2, IN_DIM), dtype=jnp.float32)
    out2 = jax.block_until_ready(encoder_forward(x2, w1, b1, w2, b2))
    assert out2.shape == (B2, OUT_DIM)
    assert jnp.allclose(out2, ref_fn(x2), atol=1e-4, rtol=1e-4)

    # bf16 inputs/weights (v6e/v7x HBM-bound path), f32 accumulation on the MXU.
    out_bf = jax.block_until_ready(encoder_forward(x2, w1, b1, w2, b2, use_bf16=True))
    assert out_bf.shape == (B2, OUT_DIM)
    assert jnp.allclose(out_bf, ref_fn(x2), atol=5e-2, rtol=5e-2)

    print("KERNEL_OK")
</pallas_src>

<mosaic_0001>
module attributes {stable_mosaic.version = 11 : i64} {
  func.func @_encoder_kernel(%arg0: i32, %arg1: memref<8x1152xf32, #tpu.memory_space<vmem>>, %arg2: memref<1152x128xf32, #tpu.memory_space<vmem>>, %arg3: memref<1x128xf32, #tpu.memory_space<vmem>>, %arg4: memref<128x256xf32, #tpu.memory_space<vmem>>, %arg5: memref<1x256xf32, #tpu.memory_space<vmem>>, %arg6: memref<8x256xf32, #tpu.memory_space<vmem>>) attributes {dimension_semantics = [#tpu.dimension_semantics<parallel>], iteration_bounds = array<i64: 1>, scalar_prefetch = 0 : i64, scratch_operands = 0 : i64, tpu.core_type = #tpu.core_type<tc>, window_params = [{transform_indices = @transform_0, window_bounds = array<i64: 8, 1152>}, {pipeline_mode = #tpu.pipeline_mode<synchronous>, transform_indices = @transform_1, window_bounds = array<i64: 1152, 128>}, {pipeline_mode = #tpu.pipeline_mode<synchronous>, transform_indices = @transform_2, window_bounds = array<i64: 1, 128>}, {pipeline_mode = #tpu.pipeline_mode<synchronous>, transform_indices = @transform_3, window_bounds = array<i64: 128, 256>}, {pipeline_mode = #tpu.pipeline_mode<synchronous>, transform_indices = @transform_4, window_bounds = array<i64: 1, 256>}, {transform_indices = @transform_5, window_bounds = array<i64: 8, 256>}]} {
    %c0 = arith.constant 0 : index
    %c0_0 = arith.constant 0 : index
    %0 = vector.load %arg1[%c0, %c0_0] : memref<8x1152xf32, #tpu.memory_space<vmem>>, vector<8x1152xf32>
    %c0_1 = arith.constant 0 : index
    %c0_2 = arith.constant 0 : index
    %1 = vector.load %arg2[%c0_1, %c0_2] : memref<1152x128xf32, #tpu.memory_space<vmem>>, vector<1152x128xf32>
    %cst = arith.constant dense<0.000000e+00> : vector<8x128xf32>
    %2 = tpu.matmul %0, %1, %cst {dimension_numbers = #tpu.dot_dimension_numbers<[1], [0], [0], [1], [0, 0, 1, 1], [], []>} : vector<8x1152xf32>, vector<1152x128xf32>, vector<8x128xf32> -> vector<8x128xf32>
    %c0_3 = arith.constant 0 : index
    %c0_4 = arith.constant 0 : index
    %3 = vector.load %arg3[%c0_3, %c0_4] : memref<1x128xf32, #tpu.memory_space<vmem>>, vector<1x128xf32>
    %4 = vector.broadcast %3 : vector<1x128xf32> to vector<8x128xf32>
    %5 = arith.addf %2, %4 : vector<8x128xf32>
    %cst_5 = arith.constant 0.000000e+00 : f32
    %6 = vector.broadcast %cst_5 : f32 to vector<8x128xf32>
    %7 = arith.maximumf %5, %6 : vector<8x128xf32>
    %c0_6 = arith.constant 0 : index
    %c0_7 = arith.constant 0 : index
    %8 = vector.load %arg4[%c0_6, %c0_7] : memref<128x256xf32, #tpu.memory_space<vmem>>, vector<128x256xf32>
    %cst_8 = arith.constant dense<0.000000e+00> : vector<8x256xf32>
    %9 = tpu.matmul %7, %8, %cst_8 {dimension_numbers = #tpu.dot_dimension_numbers<[1], [0], [0], [1], [0, 0, 1, 1], [], []>} : vector<8x128xf32>, vector<128x256xf32>, vector<8x256xf32> -> vector<8x256xf32>
    %c0_9 = arith.constant 0 : index
    %c0_10 = arith.constant 0 : index
    %10 = vector.load %arg5[%c0_9, %c0_10] : memref<1x256xf32, #tpu.memory_space<vmem>>, vector<1x256xf32>
    %11 = vector.broadcast %10 : vector<1x256xf32> to vector<8x256xf32>
    %12 = arith.addf %9, %11 : vector<8x256xf32>
    %c0_11 = arith.constant 0 : index
    %c0_12 = arith.constant 0 : index
    %13 = vector.load %arg6[%c0_11, %c0_12] : memref<8x256xf32, #tpu.memory_space<vmem>>, vector<8x256xf32>
    tpu.vector_store %arg6[%c0_11, %c0_12], %12 {strides = array<i32>} : memref<8x256xf32, #tpu.memory_space<vmem>>, vector<8x256xf32>,
    return
  }
  func.func @transform_0(%arg0: i32) -> (i32, i32) {
    %c0_i32 = arith.constant 0 : i32
    %c0_i32_0 = arith.constant 0 : i32
    return %arg0, %c0_i32 : i32, i32
  }
  func.func @transform_1(%arg0: i32) -> (i32, i32) {
    %c0_i32 = arith.constant 0 : i32
    %c0_i32_0 = arith.constant 0 : i32
    %c0_i32_1 = arith.constant 0 : i32
    return %c0_i32, %c0_i32_0 : i32, i32
  }
  func.func @transform_2(%arg0: i32) -> (i32, i32) {
    %c0_i32 = arith.constant 0 : i32
    %c0_i32_0 = arith.constant 0 : i32
    %c0_i32_1 = arith.constant 0 : i32
    return %c0_i32, %c0_i32_0 : i32, i32
  }
  func.func @transform_3(%arg0: i32) -> (i32, i32) {
    %c0_i32 = arith.constant 0 : i32
    %c0_i32_0 = arith.constant 0 : i32
    %c0_i32_1 = arith.constant 0 : i32
    return %c0_i32, %c0_i32_0 : i32, i32
  }
  func.func @transform_4(%arg0: i32) -> (i32, i32) {
    %c0_i32 = arith.constant 0 : i32
    %c0_i32_0 = arith.constant 0 : i32
    %c0_i32_1 = arith.constant 0 : i32
    return %c0_i32, %c0_i32_0 : i32, i32
  }
  func.func @transform_5(%arg0: i32) -> (i32, i32) {
    %c0_i32 = arith.constant 0 : i32
    %c0_i32_0 = arith.constant 0 : i32
    return %arg0, %c0_i32 : i32, i32
  }
}

</mosaic_0001>

<llo_original>
// kernel: tpu_custom_call.1
$region0: #{tpu_custom_call.1}
  #allocation0 [shape = 'u32[]', space=smem, size = 0x4, offset = 0x4, fixed_abs, tag = 'smem constant byte address 0x4 - core index']
  #allocation1 [shape = 'u32[72,128]{1,0:T(1,128)}', space=vmem, size = 0x9000, scoped, tag = 'internal scratch']
  %s0 = inlined_call_operand.hbm [shape: f32[8,1152], index: 0, kind: input, shape index: {}]
  %s1 = inlined_call_operand.hbm [shape: f32[1152,128], index: 1, kind: input, shape index: {}]
  %s2 = inlined_call_operand.vmem [shape: f32[1,128], index: 2, kind: input, shape index: {}]
  %s3 = inlined_call_operand.hbm [shape: f32[128,256], index: 3, kind: input, shape index: {}]
  %s4 = inlined_call_operand.vmem [shape: f32[1,256], index: 4, kind: input, shape index: {}]
  %s5 = inlined_call_operand.hbm [shape: f32[8,256], index: 5, kind: output, shape index: {}]
  %s6 = sld [smem:[#allocation0]]
  $region42: #{tpu_custom_call.1} parent=0
    _
  %s8 = ssub.s32 1, %s6
  %s9 = scalar_select 0, %s8, %s6
  $region1: #{tpu_custom_call.1} parent=0
    #allocation2 [shape = 'u8[36864]{0}', space=vmem, size = 0x9000, scoped, tag = 'input window, operand 0, single buffered']
    #allocation3 [shape = 's32[1]{0}', space=sflag, size = 0x4, scoped, tag = 'scoped memory for tpu_custom_call.1']
    #allocation4 [shape = 's32[1]{0}', space=sflag, size = 0x4, scoped, tag = 'scoped memory for tpu_custom_call.1']
    #allocation5 [shape = 'u8[589824]{0}', space=vmem, size = 0x90000, scoped, tag = 'input window, operand 1, single buffered']
    #allocation6 [shape = 's32[1]{0}', space=sflag, size = 0x4, scoped, tag = 'scoped memory for tpu_custom_call.1']
    #allocation7 [shape = 'u8[131072]{0}', space=vmem, size = 0x20000, scoped, tag = 'input window, operand 3, single buffered']
    #allocation8 [shape = 'u8[8192]{0}', space=vmem, size = 0x2000, scoped, tag = 'output window, operand 0, single buffered']
    %10 = vsyncpa [#allocation3], 0
    %11 = vsyncpa [#allocation6], 0
    %12 = vsyncpa [#allocation4], 0
    // Predicated region
    $region2: #{tpu_custom_call.1} parent=1 // pred_check
      _
    $region3: #{tpu_custom_call.1} parent=1 // pred_check_branch
      %14 = sbr.rel (0) target = $region5
    $region4: #{tpu_custom_call.1} parent=1 // pred_region
      %16 = vsyncadd [#allocation3], 0
      %s18 = sshll.u32 %s0, 4
      %s19 = int_to_ptr.hbm [resolvable:$true] %s18
      %s20 = sshll.u32 [#allocation2], 4
      %s21 = int_to_ptr.vmem [resolvable:$true] %s20
      %23 = dma.hbm_to_vmem [thread:$0]  %s19, 1152, %s21, [#allocation3]
    $region5: #{tpu_custom_call.1} parent=1 // pred_fallthru
      _
    // Predicated region
    $region6: #{tpu_custom_call.1} parent=1 // pred_check
      _
    $region7: #{tpu_custom_call.1} parent=1 // pred_check_branch
      %25 = sbr.rel (0) target = $region9
    $region8: #{tpu_custom_call.1} parent=1 // pred_region
      %27 = vsyncadd [#allocation6], 0
      %s28 = sshll.u32 %s1, 4
      %s29 = int_to_ptr.hbm [resolvable:$true] %s28
      %s30 = sshll.u32 [#allocation5], 4
      %s31 = int_to_ptr.vmem [resolvable:$true] %s30
      %36 = dma.hbm_to_vmem [thread:$0]  %s29, 18432, %s31, [#allocation6], 128, 128, 8
    $region9: #{tpu_custom_call.1} parent=1 // pred_fallthru
      _
    // Predicated region
    $region10: #{tpu_custom_call.1} parent=1 // pred_check
      _
    $region11: #{tpu_custom_call.1} parent=1 // pred_check_branch
      %38 = sbr.rel (0) target = $region13
    $region12: #{tpu_custom_call.1} parent=1 // pred_region
      _
    $region13: #{tpu_custom_call.1} parent=1 // pred_fallthru
      _
    // Predicated region
    $region14: #{tpu_custom_call.1} parent=1 // pred_check
      _
    $region15: #{tpu_custom_call.1} parent=1 // pred_check_branch
      %40 = sbr.rel (0) target = $region17
    $region16: #{tpu_custom_call.1} parent=1 // pred_region
      %42 = vsyncadd [#allocation6], 0
      %s43 = sshll.u32 %s3, 4
      %s44 = int_to_ptr.hbm [resolvable:$true] %s43
      %s45 = sshll.u32 [#allocation7], 4
      %s46 = int_to_ptr.vmem [resolvable:$true] %s45
      %51 = dma.hbm_to_vmem [thread:$0]  %s44, 4096, %s46, [#allocation6], 256, 256, 16
    $region17: #{tpu_custom_call.1} parent=1 // pred_fallthru
      _
    // Predicated region
    $region18: #{tpu_custom_call.1} parent=1 // pred_check
      _
    $region19: #{tpu_custom_call.1} parent=1 // pred_check_branch
      %53 = sbr.rel (0) target = $region21
    $region20: #{tpu_custom_call.1} parent=1 // pred_region
      _
    $region21: #{tpu_custom_call.1} parent=1 // pred_fallthru
      _
    // Predicated region
    $region22: #{tpu_custom_call.1} parent=1 // pred_check
      _
    $region23: #{tpu_custom_call.1} parent=1 // pred_check_branch
      %55 = sbr.rel (0) target = $region25
    $region24: #{tpu_custom_call.1} parent=1 // pred_region
      %57 = dma.done [#allocation3], 1152
    $region25: #{tpu_custom_call.1} parent=1 // pred_fallthru
      _
    // Predicated region
    $region26: #{tpu_custom_call.1} parent=1 // pred_check
      _
    $region27: #{tpu_custom_call.1} parent=1 // pred_check_branch
      %59 = sbr.rel (0) target = $region29
    $region28: #{tpu_custom_call.1} parent=1 // pred_region
      %61 = dma.done [#allocation6], 18432
    $region29: #{tpu_custom_call.1} parent=1 // pred_fallthru
      _
    // Predicated region
    $region30: #{tpu_custom_call.1} parent=1 // pred_check
      _
    $region31: #{tpu_custom_call.1} parent=1 // pred_check_branch
      %63 = sbr.rel (0) target = $region33
    $region32: #{tpu_custom_call.1} parent=1 // pred_region
      %65 = dma.done [#allocation6], 4096
    $region33: #{tpu_custom_call.1} parent=1 // pred_fallthru
      _
    %v66 = vld [vmem:[#allocation2] sm:$0xff]
    %v67 = vld [vmem:[#allocation2 + $0x8] sm:$0xff]
    %v68 = vld [vmem:[#allocation2 + $0x10] sm:$0xff]
    %v69 = vld [vmem:[#allocation2 + $0x18] sm:$0xff]
    %v70 = vld [vmem:[#allocation2 + $0x20] sm:$0xff]
    %v71 = vld [vmem:[#allocation2 + $0x28] sm:$0xff]
    %v72 = vld [vmem:[#allocation2 + $0x30] sm:$0xff]
    %v73 = vld [vmem:[#allocation2 + $0x38] sm:$0xff]
    %v74 = vld [vmem:[#allocation2 + $0x40] sm:$0xff]
    %v75 = vld [vmem:[#allocation5] sm:$0xff]
    %v76 = vld [vmem:[#allocation5 + $0x8] sm:$0xff]
    %v77 = vld [vmem:[#allocation5 + $0x10] sm:$0xff]
    %v78 = vld [vmem:[#allocation5 + $0x18] sm:$0xff]
    %v79 = vld [vmem:[#allocation5 + $0x20] sm:$0xff]
    %v80 = vld [vmem:[#allocation5 + $0x28] sm:$0xff]
    %v81 = vld [vmem:[#allocation5 + $0x30] sm:$0xff]
    %v82 = vld [vmem:[#allocation5 + $0x38] sm:$0xff]
    %v83 = vld [vmem:[#allocation5 + $0x40] sm:$0xff]
    %v84 = vld [vmem:[#allocation5 + $0x48] sm:$0xff]
    %v85 = vld [vmem:[#allocation5 + $0x50] sm:$0xff]
    %v86 = vld [vmem:[#allocation5 + $0x58] sm:$0xff]
    %v87 = vld [vmem:[#allocation5 + $0x60] sm:$0xff]
    %v88 = vld [vmem:[#allocation5 + $0x68] sm:$0xff]
    %v89 = vld [vmem:[#allocation5 + $0x70] sm:$0xff]
    %v90 = vld [vmem:[#allocation5 + $0x78] sm:$0xff]
    %v91 = vld [vmem:[#allocation5 + $0x80] sm:$0xff]
    %v92 = vld [vmem:[#allocation5 + $0x88] sm:$0xff]
    %v93 = vld [vmem:[#allocation5 + $0x90] sm:$0xff]
    %v94 = vld [vmem:[#allocation5 + $0x98] sm:$0xff]
    %v95 = vld [vmem:[#allocation5 + $0xa0] sm:$0xff]
    %v96 = vld [vmem:[#allocation5 + $0xa8] sm:$0xff]
    %v97 = vld [vmem:[#allocation5 + $0xb0] sm:$0xff]
    %v98 = vld [vmem:[#allocation5 + $0xb8] sm:$0xff]
    %v99 = vld [vmem:[#allocation5 + $0xc0] sm:$0xff]
    %v100 = vld [vmem:[#allocation5 + $0xc8] sm:$0xff]
    %v101 = vld [vmem:[#allocation5 + $0xd0] sm:$0xff]
    %v102 = vld [vmem:[#allocation5 + $0xd8] sm:$0xff]
    %v103 = vld [vmem:[#allocation5 + $0xe0] sm:$0xff]
    %v104 = vld [vmem:[#allocation5 + $0xe8] sm:$0xff]
    %v105 = vld [vmem:[#allocation5 + $0xf0] sm:$0xff]
    %v106 = vld [vmem:[#allocation5 + $0xf8] sm:$0xff]
    %v107 = vld [vmem:[#allocation5 + $0x100] sm:$0xff]
    %v108 = vld [vmem:[#allocation5 + $0x108] sm:$0xff]
    %v109 = vld [vmem:[#allocation5 + $0x110] sm:$0xff]
    %v110 = vld [vmem:[#allocation5 + $0x118] sm:$0xff]
    %v111 = vld [vmem:[#allocation5 + $0x120] sm:$0xff]
    %v112 = vld [vmem:[#allocation5 + $0x128] sm:$0xff]
    %v113 = vld [vmem:[#allocation5 + $0x130] sm:$0xff]
    %v114 = vld [vmem:[#allocation5 + $0x138] sm:$0xff]
    %v115 = vld [vmem:[#allocation5 + $0x140] sm:$0xff]
    %v116 = vld [vmem:[#allocation5 + $0x148] sm:$0xff]
    %v117 = vld [vmem:[#allocation5 + $0x150] sm:$0xff]
    %v118 = vld [vmem:[#allocation5 + $0x158] sm:$0xff]
    %v119 = vld [vmem:[#allocation5 + $0x160] sm:$0xff]
    %v120 = vld [vmem:[#allocation5 + $0x168] sm:$0xff]
    %v121 = vld [vmem:[#allocation5 + $0x170] sm:$0xff]
    %v122 = vld [vmem:[#allocation5 + $0x178] sm:$0xff]
    %v123 = vld [vmem:[#allocation5 + $0x180] sm:$0xff]
    %v124 = vld [vmem:[#allocation5 + $0x188] sm:$0xff]
    %v125 = vld [vmem:[#allocation5 + $0x190] sm:$0xff]
    %v126 = vld [vmem:[#allocation5 + $0x198] sm:$0xff]
    %v127 = vld [vmem:[#allocation5 + $0x1a0] sm:$0xff]
    %v128 = vld [vmem:[#allocation5 + $0x1a8] sm:$0xff]
    %v129 = vld [vmem:[#allocation5 + $0x1b0] sm:$0xff]
    %v130 = vld [vmem:[#allocation5 + $0x1b8] sm:$0xff]
    %v131 = vld [vmem:[#allocation5 + $0x1c0] sm:$0xff]
    %v132 = vld [vmem:[#allocation5 + $0x1c8] sm:$0xff]
    %v133 = vld [vmem:[#allocation5 + $0x1d0] sm:$0xff]
    %v134 = vld [vmem:[#allocation5 + $0x1d8] sm:$0xff]
    %v135 = vld [vmem:[#allocation5 + $0x1e0] sm:$0xff]
    %v136 = vld [vmem:[#allocation5 + $0x1e8] sm:$0xff]
    %v137 = vld [vmem:[#allocation5 + $0x1f0] sm:$0xff]
    %v138 = vld [vmem:[#allocation5 + $0x1f8] sm:$0xff]
    %v139 = vld [vmem:[#allocation5 + $0x200] sm:$0xff]
    %v140 = vld [vmem:[#allocation5 + $0x208] sm:$0xff]
    %v141 = vld [vmem:[#allocation5 + $0x210] sm:$0xff]
    %v142 = vld [vmem:[#allocation5 + $0x218] sm:$0xff]
    %v143 = vld [vmem:[#allocation5 + $0x220] sm:$0xff]
    %v144 = vld [vmem:[#allocation5 + $0x228] sm:$0xff]
    %v145 = vld [vmem:[#allocation5 + $0x230] sm:$0xff]
    %v146 = vld [vmem:[#allocation5 + $0x238] sm:$0xff]
    %v147 = vld [vmem:[#allocation5 + $0x240] sm:$0xff]
    %v148 = vld [vmem:[#allocation5 + $0x248] sm:$0xff]
    %v149 = vld [vmem:[#allocation5 + $0x250] sm:$0xff]
    %v150 = vld [vmem:[#allocation5 + $0x258] sm:$0xff]
    %v151 = vld [vmem:[#allocation5 + $0x260] sm:$0xff]
    %v152 = vld [vmem:[#allocation5 + $0x268] sm:$0xff]
    %v153 = vld [vmem:[#allocation5 + $0x270] sm:$0xff]
    %v154 = vld [vmem:[#allocation5 + $0x278] sm:$0xff]
    %v155 = vld [vmem:[#allocation5 + $0x280] sm:$0xff]
    %v156 = vld [vmem:[#allocation5 + $0x288] sm:$0xff]
    %v157 = vld [vmem:[#allocation5 + $0x290] sm:$0xff]
    %v158 = vld [vmem:[#allocation5 + $0x298] sm:$0xff]
    %v159 = vld [vmem:[#allocation5 + $0x2a0] sm:$0xff]
    %v160 = vld [vmem:[#allocation5 + $0x2a8] sm:$0xff]
    %v161 = vld [vmem:[#allocation5 + $0x2b0] sm:$0xff]
    %v162 = vld [vmem:[#allocation5 + $0x2b8] sm:$0xff]
    %v163 = vld [vmem:[#allocation5 + $0x2c0] sm:$0xff]
    %v164 = vld [vmem:[#allocation5 + $0x2c8] sm:$0xff]
    %v165 = vld [vmem:[#allocation5 + $0x2d0] sm:$0xff]
    %v166 = vld [vmem:[#allocation5 + $0x2d8] sm:$0xff]
    %v167 = vld [vmem:[#allocation5 + $0x2e0] sm:$0xff]
    %v168 = vld [vmem:[#allocation5 + $0x2e8] sm:$0xff]
    %v169 = vld [vmem:[#allocation5 + $0x2f0] sm:$0xff]
    %v170 = vld [vmem:[#allocation5 + $0x2f8] sm:$0xff]
    %v171 = vld [vmem:[#allocation5 + $0x300] sm:$0xff]
    %v172 = vld [vmem:[#allocation5 + $0x308] sm:$0xff]
    %v173 = vld [vmem:[#allocation5 + $0x310] sm:$0xff]
    %v174 = vld [vmem:[#allocation5 + $0x318] sm:$0xff]
    %v175 = vld [vmem:[#allocation5 + $0x320] sm:$0xff]
    %v176 = vld [vmem:[#allocation5 + $0x328] sm:$0xff]
    %v177 = vld [vmem:[#allocation5 + $0x330] sm:$0xff]
    %v178 = vld [vmem:[#allocation5 + $0x338] sm:$0xff]
    %v179 = vld [vmem:[#allocation5 + $0x340] sm:$0xff]
    %v180 = vld [vmem:[#allocation5 + $0x348] sm:$0xff]
    %v181 = vld [vmem:[#allocation5 + $0x350] sm:$0xff]
    %v182 = vld [vmem:[#allocation5 + $0x358] sm:$0xff]
    %v183 = vld [vmem:[#allocation5 + $0x360] sm:$0xff]
    %v184 = vld [vmem:[#allocation5 + $0x368] sm:$0xff]
    %v185 = vld [vmem:[#allocation5 + $0x370] sm:$0xff]
    %v186 = vld [vmem:[#allocation5 + $0x378] sm:$0xff]
    %v187 = vld [vmem:[#allocation5 + $0x380] sm:$0xff]
    %v188 = vld [vmem:[#allocation5 + $0x388] sm:$0xff]
    %v189 = vld [vmem:[#allocation5 + $0x390] sm:$0xff]
    %v190 = vld [vmem:[#allocation5 + $0x398] sm:$0xff]
    %v191 = vld [vmem:[#allocation5 + $0x3a0] sm:$0xff]
    %v192 = vld [vmem:[#allocation5 + $0x3a8] sm:$0xff]
    %v193 = vld [vmem:[#allocation5 + $0x3b0] sm:$0xff]
    %v194 = vld [vmem:[#allocation5 + $0x3b8] sm:$0xff]
    %v195 = vld [vmem:[#allocation5 + $0x3c0] sm:$0xff]
    %v196 = vld [vmem:[#allocation5 + $0x3c8] sm:$0xff]
    %v197 = vld [vmem:[#allocation5 + $0x3d0] sm:$0xff]
    %v198 = vld [vmem:[#allocation5 + $0x3d8] sm:$0xff]
    %v199 = vld [vmem:[#allocation5 + $0x3e0] sm:$0xff]
    %v200 = vld [vmem:[#allocation5 + $0x3e8] sm:$0xff]
    %v201 = vld [vmem:[#allocation5 + $0x3f0] sm:$0xff]
    %v202 = vld [vmem:[#allocation5 + $0x3f8] sm:$0xff]
    %v203 = vld [vmem:[#allocation5 + $0x400] sm:$0xff]
    %v204 = vld [vmem:[#allocation5 + $0x408] sm:$0xff]
    %v205 = vld [vmem:[#allocation5 + $0x410] sm:$0xff]
    %v206 = vld [vmem:[#allocation5 + $0x418] sm:$0xff]
    %v207 = vld [vmem:[#allocation5 + $0x420] sm:$0xff]
    %v208 = vld [vmem:[#allocation5 + $0x428] sm:$0xff]
    %v209 = vld [vmem:[#allocation5 + $0x430] sm:$0xff]
    %v210 = vld [vmem:[#allocation5 + $0x438] sm:$0xff]
    %v211 = vld [vmem:[#allocation5 + $0x440] sm:$0xff]
    %v212 = vld [vmem:[#allocation5 + $0x448] sm:$0xff]
    %v213 = vld [vmem:[#allocation5 + $0x450] sm:$0xff]
    %v214 = vld [vmem:[#allocation5 + $0x458] sm:$0xff]
    %v215 = vld [vmem:[#allocation5 + $0x460] sm:$0xff]
    %v216 = vld [vmem:[#allocation5 + $0x468] sm:$0xff]
    %v217 = vld [vmem:[#allocation5 + $0x470] sm:$0xff]
    %v218 = vld [vmem:[#allocation5 + $0x478] sm:$0xff]
    %v219 = vld [vmem:[%s2] sm:$0x1]
    %v221 = vperm.slane %v219, 0
    %223 = vmatpush.msra.mxu0 %v90
    %224 = vmatpush.msra.mxu0 %v89
    %225 = vmatpush.msra.mxu0 %v88
    %226 = vmatpush.msra.mxu0 %v87
    %227 = vmatpush.msra.mxu0 %v86
    %228 = vmatpush.msra.mxu0 %v85
    %229 = vmatpush.msra.mxu0 %v84
    %230 = vmatpush.msra.mxu0 %v83
    %231 = vmatpush.msra.mxu0 %v82
    %232 = vmatpush.msra.mxu0 %v81
    %233 = vmatpush.msra.mxu0 %v80
    %234 = vmatpush.msra.mxu0 %v79
    %235 = vmatpush.msra.mxu0 %v78
    %236 = vmatpush.msra.mxu0 %v77
    %237 = vmatpush.msra.mxu0 %v76
    %238 = vmatpush.msra.mxu0 %v75
    %239 = vmatmul.f32.gmra.mxu0 %v66
    %v240 = vpop.f32.mrf.mxu0
    %v241 = vadd.f32 %v221, %v240
    %242 = vdwg.mxu0
    %243 = vmatpush.msra.mxu0 %v106
    %244 = vmatpush.msra.mxu0 %v105
    %245 = vmatpush.msra.mxu0 %v104
    %246 = vmatpush.msra.mxu0 %v103
    %247 = vmatpush.msra.mxu0 %v102
    %248 = vmatpush.msra.mxu0 %v101
    %249 = vmatpush.msra.mxu0 %v100
    %250 = vmatpush.msra.mxu0 %v99
    %251 = vmatpush.msra.mxu0 %v98
    %252 = vmatpush.msra.mxu0 %v97
    %253 = vmatpush.msra.mxu0 %v96
    %254 = vmatpush.msra.mxu0 %v95
    %255 = vmatpush.msra.mxu0 %v94
    %256 = vmatpush.msra.mxu0 %v93
    %257 = vmatpush.msra.mxu0 %v92
    %258 = vmatpush.msra.mxu0 %v91
    %259 = vmatmul.f32.gmra.mxu0 %v67
    %v260 = vpop.f32.mrf.mxu0
    %v261 = vadd.f32 %v241, %v260
    %262 = vdwg.mxu0
    %263 = vmatpush.msra.mxu0 %v122
    %264 = vmatpush.msra.mxu0 %v121
    %265 = vmatpush.msra.mxu0 %v120
    %266 = vmatpush.msra.mxu0 %v119
    %267 = vmatpush.msra.mxu0 %v118
    %268 = vmatpush.msra.mxu0 %v117
    %269 = vmatpush.msra.mxu0 %v116
    %270 = vmatpush.msra.mxu0 %v115
    %271 = vmatpush.msra.mxu0 %v114
    %272 = vmatpush.msra.mxu0 %v113
    %273 = vmatpush.msra.mxu0 %v112
    %274 = vmatpush.msra.mxu0 %v111
    %275 = vmatpush.msra.mxu0 %v110
    %276 = vmatpush.msra.mxu0 %v109
    %277 = vmatpush.msra.mxu0 %v108
    %278 = vmatpush.msra.mxu0 %v107
    %279 = vmatmul.f32.gmra.mxu0 %v68
    %v280 = vpop.f32.mrf.mxu0
    %v281 = vadd.f32 %v261, %v280
    %282 = vdwg.mxu0
    %283 = vmatpush.msra.mxu0 %v138
    %284 = vmatpush.msra.mxu0 %v137
    %285 = vmatpush.msra.mxu0 %v136
    %286 = vmatpush.msra.mxu0 %v135
    %287 = vmatpush.msra.mxu0 %v134
    %288 = vmatpush.msra.mxu0 %v133
    %289 = vmatpush.msra.mxu0 %v132
    %290 = vmatpush.msra.mxu0 %v131
    %291 = vmatpush.msra.mxu0 %v130
    %292 = vmatpush.msra.mxu0 %v129
    %293 = vmatpush.msra.mxu0 %v128
    %294 = vmatpush.msra.mxu0 %v127
    %295 = vmatpush.msra.mxu0 %v126
    %296 = vmatpush.msra.mxu0 %v125
    %297 = vmatpush.msra.mxu0 %v124
    %298 = vmatpush.msra.mxu0 %v123
    %299 = vmatmul.f32.gmra.mxu0 %v69
    %v300 = vpop.f32.mrf.mxu0
    %v301 = vadd.f32 %v281, %v300
    %302 = vdwg.mxu0
    %303 = vmatpush.msra.mxu0 %v154
    %304 = vmatpush.msra.mxu0 %v153
    %305 = vmatpush.msra.mxu0 %v152
    %306 = vmatpush.msra.mxu0 %v151
    %307 = vmatpush.msra.mxu0 %v150
    %308 = vmatpush.msra.mxu0 %v149
    %309 = vmatpush.msra.mxu0 %v148
    %310 = vmatpush.msra.mxu0 %v147
    %311 = vmatpush.msra.mxu0 %v146
    %312 = vmatpush.msra.mxu0 %v145
    %313 = vmatpush.msra.mxu0 %v144
    %314 = vmatpush.msra.mxu0 %v143
    %315 = vmatpush.msra.mxu0 %v142
    %316 = vmatpush.msra.mxu0 %v141
    %317 = vmatpush.msra.mxu0 %v140
    %318 = vmatpush.msra.mxu0 %v139
    %319 = vmatmul.f32.gmra.mxu0 %v70
    %v320 = vpop.f32.mrf.mxu0
    %v321 = vadd.f32 %v301, %v320
    %322 = vdwg.mxu0
    %323 = vmatpush.msra.mxu0 %v170
    %324 = vmatpush.msra.mxu0 %v169
    %325 = vmatpush.msra.mxu0 %v168
    %326 = vmatpush.msra.mxu0 %v167
    %327 = vmatpush.msra.mxu0 %v166
    %328 = vmatpush.msra.mxu0 %v165
    %329 = vmatpush.msra.mxu0 %v164
    %330 = vmatpush.msra.mxu0 %v163
    %331 = vmatpush.msra.mxu0 %v162
    %332 = vmatpush.msra.mxu0 %v161
    %333 = vmatpush.msra.mxu0 %v160
    %334 = vmatpush.msra.mxu0 %v159
    %335 = vmatpush.msra.mxu0 %v158
    %336 = vmatpush.msra.mxu0 %v157
    %337 = vmatpush.msra.mxu0 %v156
    %338 = vmatpush.msra.mxu0 %v155
    %339 = vmatmul.f32.gmra.mxu0 %v71
    %v340 = vpop.f32.mrf.mxu0
    %v341 = vadd.f32 %v321, %v340
    %342 = vdwg.mxu0
    %343 = vmatpush.msra.mxu0 %v186
    %344 = vmatpush.msra.mxu0 %v185
    %345 = vmatpush.msra.mxu0 %v184
    %346 = vmatpush.msra.mxu0 %v183
    %347 = vmatpush.msra.mxu0 %v182
    %348 = vmatpush.msra.mxu0 %v181
    %349 = vmatpush.msra.mxu0 %v180
    %350 = vmatpush.msra.mxu0 %v179
    %351 = vmatpush.msra.mxu0 %v178
    %352 = vmatpush.msra.mxu0 %v177
    %353 = vmatpush.msra.mxu0 %v176
    %354 = vmatpush.msra.mxu0 %v175
    %355 = vmatpush.msra.mxu0 %v174
    %356 = vmatpush.msra.mxu0 %v173
    %357 = vmatpush.msra.mxu0 %v172
    %358 = vmatpush.msra.mxu0 %v171
    %359 = vmatmul.f32.gmra.mxu0 %v72
    %v360 = vpop.f32.mrf.mxu0
    %v361 = vadd.f32 %v341, %v360
    %362 = vdwg.mxu0
    %363 = vmatpush.msra.mxu0 %v202
    %364 = vmatpush.msra.mxu0 %v201
    %365 = vmatpush.msra.mxu0 %v200
    %366 = vmatpush.msra.mxu0 %v199
    %367 = vmatpush.msra.mxu0 %v198
    %368 = vmatpush.msra.mxu0 %v197
    %369 = vmatpush.msra.mxu0 %v196
    %370 = vmatpush.msra.mxu0 %v195
    %371 = vmatpush.msra.mxu0 %v194
    %372 = vmatpush.msra.mxu0 %v193
    %373 = vmatpush.msra.mxu0 %v192
    %374 = vmatpush.msra.mxu0 %v191
    %375 = vmatpush.msra.mxu0 %v190
    %376 = vmatpush.msra.mxu0 %v189
    %377 = vmatpush.msra.mxu0 %v188
    %378 = vmatpush.msra.mxu0 %v187
    %379 = vmatmul.f32.gmra.mxu0 %v73
    %v380 = vpop.f32.mrf.mxu0
    %v381 = vadd.f32 %v361, %v380
    %382 = vdwg.mxu0
    %383 = vmatpush.msra.mxu0 %v218
    %384 = vmatpush.msra.mxu0 %v217
    %385 = vmatpush.msra.mxu0 %v216
    %386 = vmatpush.msra.mxu0 %v215
    %387 = vmatpush.msra.mxu0 %v214
    %388 = vmatpush.msra.mxu0 %v213
    %389 = vmatpush.msra.mxu0 %v212
    %390 = vmatpush.msra.mxu0 %v211
    %391 = vmatpush.msra.mxu0 %v210
    %392 = vmatpush.msra.mxu0 %v209
    %393 = vmatpush.msra.mxu0 %v208
    %394 = vmatpush.msra.mxu0 %v207
    %395 = vmatpush.msra.mxu0 %v206
    %396 = vmatpush.msra.mxu0 %v205
    %397 = vmatpush.msra.mxu0 %v204
    %398 = vmatpush.msra.mxu0 %v203
    %399 = vmatmul.f32.gmra.mxu0 %v74
    %v400 = vpop.f32.mrf.mxu0
    %v401 = vadd.f32 %v381, %v400
    %402 = vdwg.mxu0
    %v403 = vmax.f32 %v401, 0.0
    %v404 = vld [vmem:[#allocation7] sm:$0xff]
    %v405 = vld [vmem:[#allocation7 + $0x8] sm:$0xff]
    %v406 = vld [vmem:[#allocation7 + $0x10] sm:$0xff]
    %v407 = vld [vmem:[#allocation7 + $0x18] sm:$0xff]
    %v408 = vld [vmem:[#allocation7 + $0x20] sm:$0xff]
    %v409 = vld [vmem:[#allocation7 + $0x28] sm:$0xff]
    %v410 = vld [vmem:[#allocation7 + $0x30] sm:$0xff]
    %v411 = vld [vmem:[#allocation7 + $0x38] sm:$0xff]
    %v412 = vld [vmem:[#allocation7 + $0x40] sm:$0xff]
    %v413 = vld [vmem:[#allocation7 + $0x48] sm:$0xff]
    %v414 = vld [vmem:[#allocation7 + $0x50] sm:$0xff]
    %v415 = vld [vmem:[#allocation7 + $0x58] sm:$0xff]
    %v416 = vld [vmem:[#allocation7 + $0x60] sm:$0xff]
    %v417 = vld [vmem:[#allocation7 + $0x68] sm:$0xff]
    %v418 = vld [vmem:[#allocation7 + $0x70] sm:$0xff]
    %v419 = vld [vmem:[#allocation7 + $0x78] sm:$0xff]
    %v420 = vld [vmem:[#allocation7 + $0x80] sm:$0xff]
    %v421 = vld [vmem:[#allocation7 + $0x88] sm:$0xff]
    %v422 = vld [vmem:[#allocation7 + $0x90] sm:$0xff]
    %v423 = vld [vmem:[#allocation7 + $0x98] sm:$0xff]
    %v424 = vld [vmem:[#allocation7 + $0xa0] sm:$0xff]
    %v425 = vld [vmem:[#allocation7 + $0xa8] sm:$0xff]
    %v426 = vld [vmem:[#allocation7 + $0xb0] sm:$0xff]
    %v427 = vld [vmem:[#allocation7 + $0xb8] sm:$0xff]
    %v428 = vld [vmem:[#allocation7 + $0xc0] sm:$0xff]
    %v429 = vld [vmem:[#allocation7 + $0xc8] sm:$0xff]
    %v430 = vld [vmem:[#allocation7 + $0xd0] sm:$0xff]
    %v431 = vld [vmem:[#allocation7 + $0xd8] sm:$0xff]
    %v432 = vld [vmem:[#allocation7 + $0xe0] sm:$0xff]
    %v433 = vld [vmem:[#allocation7 + $0xe8] sm:$0xff]
    %v434 = vld [vmem:[#allocation7 + $0xf0] sm:$0xff]
    %v435 = vld [vmem:[#allocation7 + $0xf8] sm:$0xff]
    %v436 = vld [vmem:[%s4] sm:$0x3]
    %v438 = vperm.slane %v436, 0
    %v439 = vperm.slane %v436, 1
    %442 = vmatpush.msra.mxu0 %v434
    %443 = vmatpush.msra.mxu0 %v432
    %444 = vmatpush.msra.mxu0 %v430
    %445 = vmatpush.msra.mxu0 %v428
    %446 = vmatpush.msra.mxu0 %v426
    %447 = vmatpush.msra.mxu0 %v424
    %448 = vmatpush.msra.mxu0 %v422
    %449 = vmatpush.msra.mxu0 %v420
    %450 = vmatpush.msra.mxu0 %v418
    %451 = vmatpush.msra.mxu0 %v416
    %452 = vmatpush.msra.mxu0 %v414
    %453 = vmatpush.msra.mxu0 %v412
    %454 = vmatpush.msra.mxu0 %v410
    %455 = vmatpush.msra.mxu0 %v408
    %456 = vmatpush.msra.mxu0 %v406
    %457 = vmatpush.msra.mxu0 %v404
    %458 = vmatmul.f32.gmra.mxu0 %v403
    %v459 = vpop.f32.mrf.mxu0
    %v460 = vadd.f32 %v438, %v459
    %461 = vdwg.mxu0
    %462 = vmatpush.msra.mxu0 %v435
    %463 = vmatpush.msra.mxu0 %v433
    %464 = vmatpush.msra.mxu0 %v431
    %465 = vmatpush.msra.mxu0 %v429
    %466 = vmatpush.msra.mxu0 %v427
    %467 = vmatpush.msra.mxu0 %v425
    %468 = vmatpush.msra.mxu0 %v423
    %469 = vmatpush.msra.mxu0 %v421
    %470 = vmatpush.msra.mxu0 %v419
    %471 = vmatpush.msra.mxu0 %v417
    %472 = vmatpush.msra.mxu0 %v415
    %473 = vmatpush.msra.mxu0 %v413
    %474 = vmatpush.msra.mxu0 %v411
    %475 = vmatpush.msra.mxu0 %v409
    %476 = vmatpush.msra.mxu0 %v407
    %477 = vmatpush.msra.mxu0 %v405
    %478 = vmatmul.f32.gmra.mxu0 %v403
    %v479 = vpop.f32.mrf.mxu0
    %v480 = vadd.f32 %v439, %v479
    %481 = vdwg.mxu0
    %482 = vst [vmem:[#allocation8] sm:$0xff] %v460
    %483 = vst [vmem:[#allocation8 + $0x8] sm:$0xff] %v480
    // Predicated region
    $region34: #{tpu_custom_call.1} parent=1 // pred_check
      _
    $region35: #{tpu_custom_call.1} parent=1 // pred_check_branch
      %485 = sbr.rel (0) target = $region37
    $region36: #{tpu_custom_call.1} parent=1 // pred_region
      %487 = vsyncadd [#allocation4], 0
      %s489 = sshll.u32 [#allocation8], 4
      %s490 = int_to_ptr.vmem [resolvable:$true] %s489
      %s491 = sshll.u32 %s5, 4
      %s492 = int_to_ptr.hbm [resolvable:$true] %s491
      %494 = dma.vmem_to_hbm [thread:$0]  %s490, 256, %s492, [#allocation4]
    $region37: #{tpu_custom_call.1} parent=1 // pred_fallthru
      _
    // Predicated region
    $region38: #{tpu_custom_call.1} parent=1 // pred_check
      _
    $region39: #{tpu_custom_call.1} parent=1 // pred_check_branch
      %496 = sbr.rel (0) target = $region41
    $region40: #{tpu_custom_call.1} parent=1 // pred_region
      %498 = dma.done [#allocation4], 256
    $region41: #{tpu_custom_call.1} parent=1 // pred_fallthru
      _
    %499 = vsyncpa [#allocation3], 1
    %500 = vsyncpa [#allocation6], 1
    %501 = vsyncpa [#allocation4], 1

</llo_original>
